<compile_context>
chip_gen: v7x
topology: tpu7x:2x2x1
jax: 0.10.0
libtpu: 0.0.40
codegen_flags: <defaults>
</compile_context>

<pallas_src>
import functools

import jax
import jax.numpy as jnp
from jax.experimental import pallas as pl
from jax.experimental.pallas import tpu as pltpu

_LANE = 128
_SUBLANE = 8


def _round_up(x, m):
    return (x + m - 1) // m * m


def _two_layer_fc_kernel(x_ref, w1_ref, w2_ref, o_ref, *, num_classes):
    # x_ref:  (TB, Dp)  bf16   (one batch tile)
    # w1_ref: (Dp, Hp)  bf16   (VMEM-resident across batch tiles)
    # w2_ref: (Hp, Cp)  bf16   (VMEM-resident across batch tiles)
    # o_ref:  (TB, Cp)  f32    (lane-dense output tile)

    # fc1: bf16 operands on the MXU, f32 accumulate; ReLU in f32 on the VPU.
    h = jnp.dot(x_ref[...], w1_ref[...], preferred_element_type=jnp.float32)
    h = jnp.maximum(h, 0.0)

    # fc2: feed the MXU bf16 again, f32 accumulate.
    logits = jnp.dot(h.astype(jnp.bfloat16), w2_ref[...],
                     preferred_element_type=jnp.float32)

    # Mask padded class columns so they don't corrupt the softmax denominator.
    col = jax.lax.broadcasted_iota(jnp.int32, logits.shape, 1)
    logits = jnp.where(col < num_classes, logits, -jnp.inf)

    # Numerically-stable log_softmax along the class axis (f32).
    m = jnp.max(logits, axis=-1, keepdims=True)
    shifted = logits - m
    lse = jnp.log(jnp.sum(jnp.exp(shifted), axis=-1, keepdims=True))
    o_ref[...] = (shifted - lse).astype(o_ref.dtype)


def two_layer_fc(x, w1, w2, *, batch_tile=128):
    """x: (B, C, H, W) or (B, D). w1: (D, hidden). w2: (hidden, num_classes)."""
    B = x.shape[0]
    x2d = x.reshape(B, -1).astype(jnp.float32)   # x.view(B, -1)
    D, H = w1.shape
    H2, C = w2.shape
    assert x2d.shape[1] == D and H2 == H

    # Pad to MXU / vreg friendly shapes (lane multiples of 128, sublane multiples of 8).
    Dp = _round_up(D, _LANE)
    Hp = _round_up(H, _LANE)
    Cp = _round_up(C, _LANE)
    TB = min(_round_up(B, _SUBLANE), _round_up(batch_tile, _SUBLANE))
    Bp = _round_up(B, TB)

    # Zero padding is exact: zero rows/cols contribute 0 through both matmuls and ReLU.
    x_p = jnp.zeros((Bp, Dp), jnp.bfloat16).at[:B, :D].set(x2d.astype(jnp.bfloat16))
    w1_p = jnp.zeros((Dp, Hp), jnp.bfloat16).at[:D, :H].set(w1.astype(jnp.bfloat16))
    w2_p = jnp.zeros((Hp, Cp), jnp.bfloat16).at[:H, :C].set(w2.astype(jnp.bfloat16))

    grid = (Bp // TB,)
    kernel = functools.partial(_two_layer_fc_kernel, num_classes=C)

    cost = pl.CostEstimate(
        flops=2 * Bp * (Dp * Hp + Hp * Cp),
        transcendentals=Bp * Cp,
        bytes_accessed=(x_p.size + w1_p.size + w2_p.size) * 2 + Bp * Cp * 4,
    )

    # VMEM budget: double-buffered x tile + resident bf16 weights + double-buffered
    # f32 output tile, plus headroom; never below the default scoped limit.
    vmem_need = (2 * TB * Dp * 2) + (Dp * Hp * 2) + (Hp * Cp * 2) + (2 * TB * Cp * 4)
    vmem_limit = max(vmem_need + (8 << 20), 32 << 20)

    # TODO(synk): for very large input_size, add a K-reduction grid axis over D with a
    # VMEM f32 accumulator (pl.when init / finalize) so w1 tiles fit v7x's 64 MiB VMEM.

    out_p = pl.pallas_call(
        kernel,
        out_shape=jax.ShapeDtypeStruct((Bp, Cp), jnp.float32),
        grid_spec=pltpu.PrefetchScalarGridSpec(
            num_scalar_prefetch=0,
            grid=grid,
            in_specs=[
                pl.BlockSpec((TB, Dp), lambda i: (i, 0)),
                pl.BlockSpec((Dp, Hp), lambda i: (0, 0)),   # weights stay resident
                pl.BlockSpec((Hp, Cp), lambda i: (0, 0)),   # weights stay resident
            ],
            out_specs=pl.BlockSpec((TB, Cp), lambda i: (i, 0)),
        ),
        compiler_params=pltpu.CompilerParams(
            dimension_semantics=("parallel",),
            vmem_limit_bytes=int(vmem_limit),
        ),
        cost_estimate=cost,
    )(x_p, w1_p, w2_p)

    # Slice away batch / class padding.
    return out_p[:B, :C]


def init_params(key, input_size, hidden_size, num_classes):
    """Deterministic init mimicking nn.Linear's kaiming-uniform scale (bias=None)."""
    k1, k2 = jax.random.split(key)
    b1 = 1.0 / jnp.sqrt(input_size)
    b2 = 1.0 / jnp.sqrt(hidden_size)
    # stored transposed relative to PyTorch: (in, out)
    w1 = jax.random.uniform(k1, (input_size, hidden_size),
                            minval=-b1, maxval=b1, dtype=jnp.float32)
    w2 = jax.random.uniform(k2, (hidden_size, num_classes),
                            minval=-b2, maxval=b2, dtype=jnp.float32)
    return w1, w2


if __name__ == "__main__":
    key = jax.random.PRNGKey(0)
    kx, kp = jax.random.split(key)

    # small shapes consistent with forward's x.view(B, -1)
    B, Cc, Hs, Ws = 2, 4, 16, 16
    input_size = Cc * Hs * Ws          # 1024
    hidden_size = 32
    num_classes = 10

    x = jax.random.normal(kx, (B, Cc, Hs, Ws), dtype=jnp.float32)
    w1, w2 = init_params(kp, input_size, hidden_size, num_classes)

    out = two_layer_fc(x, w1, w2)
    out = jax.block_until_ready(out)

    # sanity check vs. pure-JAX f32 reference (loose tolerance: kernel uses bf16 MXU operands)
    x2d = x.reshape(B, -1)
    ref_logits = jnp.maximum(x2d @ w1, 0.0) @ w2
    ref = jax.nn.log_softmax(ref_logits, axis=1)
    assert out.shape == (B, num_classes)
    assert bool(jnp.all(jnp.isfinite(out)))
    assert jnp.allclose(out, ref, atol=2e-2, rtol=2e-2)

    print("KERNEL_OK")
</pallas_src>

<mosaic_0001>
module attributes {stable_mosaic.version = 11 : i64} {
  func.func @_two_layer_fc_kernel(%arg0: i32, %arg1: memref<8x1024xbf16, #tpu.memory_space<vmem>>, %arg2: memref<1024x128xbf16, #tpu.memory_space<vmem>>, %arg3: memref<128x128xbf16, #tpu.memory_space<vmem>>, %arg4: memref<8x128xf32, #tpu.memory_space<vmem>>) attributes {dimension_semantics = [#tpu.dimension_semantics<parallel>], iteration_bounds = array<i64: 1>, scalar_prefetch = 0 : i64, scratch_operands = 0 : i64, tpu.core_type = #tpu.core_type<tc>, window_params = [{transform_indices = @transform_0, window_bounds = array<i64: 8, 1024>}, {pipeline_mode = #tpu.pipeline_mode<synchronous>, transform_indices = @transform_1, window_bounds = array<i64: 1024, 128>}, {pipeline_mode = #tpu.pipeline_mode<synchronous>, transform_indices = @transform_2, window_bounds = array<i64: 128, 128>}, {transform_indices = @transform_3, window_bounds = array<i64: 8, 128>}]} {
    %c0 = arith.constant 0 : index
    %c0_0 = arith.constant 0 : index
    %0 = vector.load %arg1[%c0, %c0_0] : memref<8x1024xbf16, #tpu.memory_space<vmem>>, vector<8x1024xbf16>
    %c0_1 = arith.constant 0 : index
    %c0_2 = arith.constant 0 : index
    %1 = vector.load %arg2[%c0_1, %c0_2] : memref<1024x128xbf16, #tpu.memory_space<vmem>>, vector<1024x128xbf16>
    %cst = arith.constant dense<0.000000e+00> : vector<8x128xf32>
    %2 = tpu.matmul %0, %1, %cst {dimension_numbers = #tpu.dot_dimension_numbers<[1], [0], [0], [1], [0, 0, 1, 1], [], []>} : vector<8x1024xbf16>, vector<1024x128xbf16>, vector<8x128xf32> -> vector<8x128xf32>
    %cst_3 = arith.constant 0.000000e+00 : f32
    %3 = vector.broadcast %cst_3 : f32 to vector<8x128xf32>
    %4 = arith.maximumf %2, %3 : vector<8x128xf32>
    %5 = arith.truncf %4 : vector<8x128xf32> to vector<8x128xbf16>
    %c0_4 = arith.constant 0 : index
    %c0_5 = arith.constant 0 : index
    %6 = vector.load %arg3[%c0_4, %c0_5] : memref<128x128xbf16, #tpu.memory_space<vmem>>, vector<128x128xbf16>
    %cst_6 = arith.constant dense<0.000000e+00> : vector<8x128xf32>
    %7 = tpu.matmul %5, %6, %cst_6 {dimension_numbers = #tpu.dot_dimension_numbers<[1], [0], [0], [1], [0, 0, 1, 1], [], []>} : vector<8x128xbf16>, vector<128x128xbf16>, vector<8x128xf32> -> vector<8x128xf32>
    %8 = tpu.iota {dimensions = array<i32: 1>} : vector<8x128xi32>
    %c10_i32 = arith.constant 10 : i32
    %9 = vector.broadcast %c10_i32 : i32 to vector<8x128xi32>
    %10 = arith.cmpi slt, %8, %9 : vector<8x128xi32>
    %cst_7 = arith.constant 0xFF800000 : f32
    %11 = vector.broadcast %cst_7 : f32 to vector<8x128xf32>
    %12 = arith.select %10, %7, %11 : vector<8x128xi1>, vector<8x128xf32>
    %cst_8 = arith.constant dense<0xFF800000> : vector<8xf32>
    %13 = vector.multi_reduction <maximumf>, %12, %cst_8 [1] : vector<8x128xf32> to vector<8xf32>
    %14 = vector.shape_cast %13 : vector<8xf32> to vector<8x1xf32>
    %15 = vector.broadcast %14 : vector<8x1xf32> to vector<8x128xf32>
    %16 = arith.subf %12, %15 : vector<8x128xf32>
    %17 = math.exp %16 : vector<8x128xf32>
    %cst_9 = arith.constant dense<0.000000e+00> : vector<8xf32>
    %18 = vector.multi_reduction <add>, %17, %cst_9 [1] : vector<8x128xf32> to vector<8xf32>
    %19 = vector.shape_cast %18 : vector<8xf32> to vector<8x1xf32>
    %20 = math.log %19 : vector<8x1xf32>
    %21 = vector.broadcast %20 : vector<8x1xf32> to vector<8x128xf32>
    %22 = arith.subf %16, %21 : vector<8x128xf32>
    %c0_10 = arith.constant 0 : index
    %c0_11 = arith.constant 0 : index
    %23 = vector.load %arg4[%c0_10, %c0_11] : memref<8x128xf32, #tpu.memory_space<vmem>>, vector<8x128xf32>
    tpu.vector_store %arg4[%c0_10, %c0_11], %22 {strides = array<i32>} : memref<8x128xf32, #tpu.memory_space<vmem>>, vector<8x128xf32>,
    return
  }
  func.func @transform_0(%arg0: i32) -> (i32, i32) {
    %c0_i32 = arith.constant 0 : i32
    %c0_i32_0 = arith.constant 0 : i32
    return %arg0, %c0_i32 : i32, i32
  }
  func.func @transform_1(%arg0: i32) -> (i32, i32) {
    %c0_i32 = arith.constant 0 : i32
    %c0_i32_0 = arith.constant 0 : i32
    %c0_i32_1 = arith.constant 0 : i32
    return %c0_i32, %c0_i32_0 : i32, i32
  }
  func.func @transform_2(%arg0: i32) -> (i32, i32) {
    %c0_i32 = arith.constant 0 : i32
    %c0_i32_0 = arith.constant 0 : i32
    %c0_i32_1 = arith.constant 0 : i32
    return %c0_i32, %c0_i32_0 : i32, i32
  }
  func.func @transform_3(%arg0: i32) -> (i32, i32) {
    %c0_i32 = arith.constant 0 : i32
    %c0_i32_0 = arith.constant 0 : i32
    return %arg0, %c0_i32 : i32, i32
  }
}

</mosaic_0001>

<llo_original>
// kernel: tpu_custom_call.1
$region0: #{tpu_custom_call.1}
  #allocation0 [shape = 'u32[]', space=smem, size = 0x4, offset = 0x4, fixed_abs, tag = 'smem constant byte address 0x4 - core index']
  #allocation1 [shape = 'u32[144,128]{1,0:T(1,128)}', space=vmem, size = 0x12000, scoped, tag = 'internal scratch']
  %s0 = inlined_call_operand.hbm [shape: bf16[8,1024], index: 0, kind: input, shape index: {}]
  %s1 = inlined_call_operand.hbm [shape: bf16[1024,128], index: 1, kind: input, shape index: {}]
  %s2 = inlined_call_operand.hbm [shape: bf16[128,128], index: 2, kind: input, shape index: {}]
  %s3 = inlined_call_operand.hbm [shape: f32[8,128], index: 3, kind: output, shape index: {}]
  %s4 = sld [smem:[#allocation0]]
  $region34: #{tpu_custom_call.1} parent=0
    _
  %s6 = ssub.s32 1, %s4
  %s7 = scalar_select 0, %s6, %s4
  $region1: #{tpu_custom_call.1} parent=0
    #allocation2 [shape = 'u8[16384]{0}', space=vmem, size = 0x4000, scoped, tag = 'input window, operand 0, single buffered']
    #allocation3 [shape = 's32[1]{0}', space=sflag, size = 0x4, scoped, tag = 'scoped memory for tpu_custom_call.1']
    #allocation4 [shape = 's32[1]{0}', space=sflag, size = 0x4, scoped, tag = 'scoped memory for tpu_custom_call.1']
    #allocation5 [shape = 'u8[262144]{0}', space=vmem, size = 0x40000, scoped, tag = 'input window, operand 1, single buffered']
    #allocation6 [shape = 's32[1]{0}', space=sflag, size = 0x4, scoped, tag = 'scoped memory for tpu_custom_call.1']
    #allocation7 [shape = 'u8[32768]{0}', space=vmem, size = 0x8000, scoped, tag = 'input window, operand 2, single buffered']
    #allocation8 [shape = 'u8[4096]{0}', space=vmem, size = 0x1000, scoped, tag = 'output window, operand 0, single buffered']
    %8 = vsyncpa [#allocation3], 0
    %9 = vsyncpa [#allocation6], 0
    %10 = vsyncpa [#allocation4], 0
    // Predicated region
    $region2: #{tpu_custom_call.1} parent=1 // pred_check
      _
    $region3: #{tpu_custom_call.1} parent=1 // pred_check_branch
      %12 = sbr.rel (0) target = $region5
    $region4: #{tpu_custom_call.1} parent=1 // pred_region
      %s14 = ssub.s32 512, 512
      %15 = vsyncadd [#allocation3], %s14
      %s17 = sshll.u32 [#allocation2], 4
      %s18 = int_to_ptr.vmem [resolvable:$true] %s17
      %20 = dma.hbm_to_vmem [thread:$0]  %s0, 512, %s18, [#allocation3]
    $region5: #{tpu_custom_call.1} parent=1 // pred_fallthru
      _
    // Predicated region
    $region6: #{tpu_custom_call.1} parent=1 // pred_check
      _
    $region7: #{tpu_custom_call.1} parent=1 // pred_check_branch
      %22 = sbr.rel (0) target = $region9
    $region8: #{tpu_custom_call.1} parent=1 // pred_region
      %s24 = ssub.s32 8192, 8192
      %25 = vsyncadd [#allocation6], %s24
      %s26 = sshll.u32 [#allocation5], 4
      %s27 = int_to_ptr.vmem [resolvable:$true] %s26
      %32 = dma.hbm_to_vmem [thread:$0]  %s1, 8192, %s27, [#allocation6], 64, 64, 4
    $region9: #{tpu_custom_call.1} parent=1 // pred_fallthru
      _
    // Predicated region
    $region10: #{tpu_custom_call.1} parent=1 // pred_check
      _
    $region11: #{tpu_custom_call.1} parent=1 // pred_check_branch
      %34 = sbr.rel (0) target = $region13
    $region12: #{tpu_custom_call.1} parent=1 // pred_region
      %s36 = ssub.s32 1024, 1024
      %37 = vsyncadd [#allocation6], %s36
      %s38 = sshll.u32 [#allocation7], 4
      %s39 = int_to_ptr.vmem [resolvable:$true] %s38
      %44 = dma.hbm_to_vmem [thread:$0]  %s2, 1024, %s39, [#allocation6], 64, 64, 4
    $region13: #{tpu_custom_call.1} parent=1 // pred_fallthru
      _
    // Predicated region
    $region14: #{tpu_custom_call.1} parent=1 // pred_check
      _
    $region15: #{tpu_custom_call.1} parent=1 // pred_check_branch
      %46 = sbr.rel (0) target = $region17
    $region16: #{tpu_custom_call.1} parent=1 // pred_region
      %47 = dma.done [#allocation3], 512
    $region17: #{tpu_custom_call.1} parent=1 // pred_fallthru
      _
    // Predicated region
    $region18: #{tpu_custom_call.1} parent=1 // pred_check
      _
    $region19: #{tpu_custom_call.1} parent=1 // pred_check_branch
      %49 = sbr.rel (0) target = $region21
    $region20: #{tpu_custom_call.1} parent=1 // pred_region
      %50 = dma.done [#allocation6], 8192
    $region21: #{tpu_custom_call.1} parent=1 // pred_fallthru
      _
    // Predicated region
    $region22: #{tpu_custom_call.1} parent=1 // pred_check
      _
    $region23: #{tpu_custom_call.1} parent=1 // pred_check_branch
      %52 = sbr.rel (0) target = $region25
    $region24: #{tpu_custom_call.1} parent=1 // pred_region
      %53 = dma.done [#allocation6], 1024
    $region25: #{tpu_custom_call.1} parent=1 // pred_fallthru
      _
    %v55 = vld [vmem:[#allocation2] sm:$0xff]
    %v56 = vld [vmem:[#allocation2 + $0x8] sm:$0xff]
    %v57 = vld [vmem:[#allocation2 + $0x10] sm:$0xff]
    %v58 = vld [vmem:[#allocation2 + $0x18] sm:$0xff]
    %v59 = vld [vmem:[#allocation5] sm:$0xf]
    %v60 = vld [vmem:[#allocation5 + $0x4] sm:$0xf]
    %v61 = vld [vmem:[#allocation5 + $0x8] sm:$0xf]
    %v62 = vld [vmem:[#allocation5 + $0xc] sm:$0xf]
    %v63 = vld [vmem:[#allocation5 + $0x10] sm:$0xf]
    %v64 = vld [vmem:[#allocation5 + $0x14] sm:$0xf]
    %v65 = vld [vmem:[#allocation5 + $0x18] sm:$0xf]
    %v66 = vld [vmem:[#allocation5 + $0x1c] sm:$0xf]
    %v67 = vld [vmem:[#allocation5 + $0x20] sm:$0xf]
    %v68 = vld [vmem:[#allocation5 + $0x24] sm:$0xf]
    %v69 = vld [vmem:[#allocation5 + $0x28] sm:$0xf]
    %v70 = vld [vmem:[#allocation5 + $0x2c] sm:$0xf]
    %v71 = vld [vmem:[#allocation5 + $0x30] sm:$0xf]
    %v72 = vld [vmem:[#allocation5 + $0x34] sm:$0xf]
    %v73 = vld [vmem:[#allocation5 + $0x38] sm:$0xf]
    %v74 = vld [vmem:[#allocation5 + $0x3c] sm:$0xf]
    %v75 = vld [vmem:[#allocation5 + $0x40] sm:$0xf]
    %v76 = vld [vmem:[#allocation5 + $0x44] sm:$0xf]
    %v77 = vld [vmem:[#allocation5 + $0x48] sm:$0xf]
    %v78 = vld [vmem:[#allocation5 + $0x4c] sm:$0xf]
    %v79 = vld [vmem:[#allocation5 + $0x50] sm:$0xf]
    %v80 = vld [vmem:[#allocation5 + $0x54] sm:$0xf]
    %v81 = vld [vmem:[#allocation5 + $0x58] sm:$0xf]
    %v82 = vld [vmem:[#allocation5 + $0x5c] sm:$0xf]
    %v83 = vld [vmem:[#allocation5 + $0x60] sm:$0xf]
    %v84 = vld [vmem:[#allocation5 + $0x64] sm:$0xf]
    %v85 = vld [vmem:[#allocation5 + $0x68] sm:$0xf]
    %v86 = vld [vmem:[#allocation5 + $0x6c] sm:$0xf]
    %v87 = vld [vmem:[#allocation5 + $0x70] sm:$0xf]
    %v88 = vld [vmem:[#allocation5 + $0x74] sm:$0xf]
    %v89 = vld [vmem:[#allocation5 + $0x78] sm:$0xf]
    %v90 = vld [vmem:[#allocation5 + $0x7c] sm:$0xf]
    %v91 = vld [vmem:[#allocation5 + $0x80] sm:$0xf]
    %v92 = vld [vmem:[#allocation5 + $0x84] sm:$0xf]
    %v93 = vld [vmem:[#allocation5 + $0x88] sm:$0xf]
    %v94 = vld [vmem:[#allocation5 + $0x8c] sm:$0xf]
    %v95 = vld [vmem:[#allocation5 + $0x90] sm:$0xf]
    %v96 = vld [vmem:[#allocation5 + $0x94] sm:$0xf]
    %v97 = vld [vmem:[#allocation5 + $0x98] sm:$0xf]
    %v98 = vld [vmem:[#allocation5 + $0x9c] sm:$0xf]
    %v99 = vld [vmem:[#allocation5 + $0xa0] sm:$0xf]
    %v100 = vld [vmem:[#allocation5 + $0xa4] sm:$0xf]
    %v101 = vld [vmem:[#allocation5 + $0xa8] sm:$0xf]
    %v102 = vld [vmem:[#allocation5 + $0xac] sm:$0xf]
    %v103 = vld [vmem:[#allocation5 + $0xb0] sm:$0xf]
    %v104 = vld [vmem:[#allocation5 + $0xb4] sm:$0xf]
    %v105 = vld [vmem:[#allocation5 + $0xb8] sm:$0xf]
    %v106 = vld [vmem:[#allocation5 + $0xbc] sm:$0xf]
    %v107 = vld [vmem:[#allocation5 + $0xc0] sm:$0xf]
    %v108 = vld [vmem:[#allocation5 + $0xc4] sm:$0xf]
    %v109 = vld [vmem:[#allocation5 + $0xc8] sm:$0xf]
    %v110 = vld [vmem:[#allocation5 + $0xcc] sm:$0xf]
    %v111 = vld [vmem:[#allocation5 + $0xd0] sm:$0xf]
    %v112 = vld [vmem:[#allocation5 + $0xd4] sm:$0xf]
    %v113 = vld [vmem:[#allocation5 + $0xd8] sm:$0xf]
    %v114 = vld [vmem:[#allocation5 + $0xdc] sm:$0xf]
    %v115 = vld [vmem:[#allocation5 + $0xe0] sm:$0xf]
    %v116 = vld [vmem:[#allocation5 + $0xe4] sm:$0xf]
    %v117 = vld [vmem:[#allocation5 + $0xe8] sm:$0xf]
    %v118 = vld [vmem:[#allocation5 + $0xec] sm:$0xf]
    %v119 = vld [vmem:[#allocation5 + $0xf0] sm:$0xf]
    %v120 = vld [vmem:[#allocation5 + $0xf4] sm:$0xf]
    %v121 = vld [vmem:[#allocation5 + $0xf8] sm:$0xf]
    %v122 = vld [vmem:[#allocation5 + $0xfc] sm:$0xf]
    %v123 = vld [vmem:[#allocation5 + $0x100] sm:$0xf]
    %v124 = vld [vmem:[#allocation5 + $0x104] sm:$0xf]
    %v125 = vld [vmem:[#allocation5 + $0x108] sm:$0xf]
    %v126 = vld [vmem:[#allocation5 + $0x10c] sm:$0xf]
    %v127 = vld [vmem:[#allocation5 + $0x110] sm:$0xf]
    %v128 = vld [vmem:[#allocation5 + $0x114] sm:$0xf]
    %v129 = vld [vmem:[#allocation5 + $0x118] sm:$0xf]
    %v130 = vld [vmem:[#allocation5 + $0x11c] sm:$0xf]
    %v131 = vld [vmem:[#allocation5 + $0x120] sm:$0xf]
    %v132 = vld [vmem:[#allocation5 + $0x124] sm:$0xf]
    %v133 = vld [vmem:[#allocation5 + $0x128] sm:$0xf]
    %v134 = vld [vmem:[#allocation5 + $0x12c] sm:$0xf]
    %v135 = vld [vmem:[#allocation5 + $0x130] sm:$0xf]
    %v136 = vld [vmem:[#allocation5 + $0x134] sm:$0xf]
    %v137 = vld [vmem:[#allocation5 + $0x138] sm:$0xf]
    %v138 = vld [vmem:[#allocation5 + $0x13c] sm:$0xf]
    %v139 = vld [vmem:[#allocation5 + $0x140] sm:$0xf]
    %v140 = vld [vmem:[#allocation5 + $0x144] sm:$0xf]
    %v141 = vld [vmem:[#allocation5 + $0x148] sm:$0xf]
    %v142 = vld [vmem:[#allocation5 + $0x14c] sm:$0xf]
    %v143 = vld [vmem:[#allocation5 + $0x150] sm:$0xf]
    %v144 = vld [vmem:[#allocation5 + $0x154] sm:$0xf]
    %v145 = vld [vmem:[#allocation5 + $0x158] sm:$0xf]
    %v146 = vld [vmem:[#allocation5 + $0x15c] sm:$0xf]
    %v147 = vld [vmem:[#allocation5 + $0x160] sm:$0xf]
    %v148 = vld [vmem:[#allocation5 + $0x164] sm:$0xf]
    %v149 = vld [vmem:[#allocation5 + $0x168] sm:$0xf]
    %v150 = vld [vmem:[#allocation5 + $0x16c] sm:$0xf]
    %v151 = vld [vmem:[#allocation5 + $0x170] sm:$0xf]
    %v152 = vld [vmem:[#allocation5 + $0x174] sm:$0xf]
    %v153 = vld [vmem:[#allocation5 + $0x178] sm:$0xf]
    %v154 = vld [vmem:[#allocation5 + $0x17c] sm:$0xf]
    %v155 = vld [vmem:[#allocation5 + $0x180] sm:$0xf]
    %v156 = vld [vmem:[#allocation5 + $0x184] sm:$0xf]
    %v157 = vld [vmem:[#allocation5 + $0x188] sm:$0xf]
    %v158 = vld [vmem:[#allocation5 + $0x18c] sm:$0xf]
    %v159 = vld [vmem:[#allocation5 + $0x190] sm:$0xf]
    %v160 = vld [vmem:[#allocation5 + $0x194] sm:$0xf]
    %v161 = vld [vmem:[#allocation5 + $0x198] sm:$0xf]
    %v162 = vld [vmem:[#allocation5 + $0x19c] sm:$0xf]
    %v163 = vld [vmem:[#allocation5 + $0x1a0] sm:$0xf]
    %v164 = vld [vmem:[#allocation5 + $0x1a4] sm:$0xf]
    %v165 = vld [vmem:[#allocation5 + $0x1a8] sm:$0xf]
    %v166 = vld [vmem:[#allocation5 + $0x1ac] sm:$0xf]
    %v167 = vld [vmem:[#allocation5 + $0x1b0] sm:$0xf]
    %v168 = vld [vmem:[#allocation5 + $0x1b4] sm:$0xf]
    %v169 = vld [vmem:[#allocation5 + $0x1b8] sm:$0xf]
    %v170 = vld [vmem:[#allocation5 + $0x1bc] sm:$0xf]
    %v171 = vld [vmem:[#allocation5 + $0x1c0] sm:$0xf]
    %v172 = vld [vmem:[#allocation5 + $0x1c4] sm:$0xf]
    %v173 = vld [vmem:[#allocation5 + $0x1c8] sm:$0xf]
    %v174 = vld [vmem:[#allocation5 + $0x1cc] sm:$0xf]
    %v175 = vld [vmem:[#allocation5 + $0x1d0] sm:$0xf]
    %v176 = vld [vmem:[#allocation5 + $0x1d4] sm:$0xf]
    %v177 = vld [vmem:[#allocation5 + $0x1d8] sm:$0xf]
    %v178 = vld [vmem:[#allocation5 + $0x1dc] sm:$0xf]
    %v179 = vld [vmem:[#allocation5 + $0x1e0] sm:$0xf]
    %v180 = vld [vmem:[#allocation5 + $0x1e4] sm:$0xf]
    %v181 = vld [vmem:[#allocation5 + $0x1e8] sm:$0xf]
    %v182 = vld [vmem:[#allocation5 + $0x1ec] sm:$0xf]
    %v183 = vld [vmem:[#allocation5 + $0x1f0] sm:$0xf]
    %v184 = vld [vmem:[#allocation5 + $0x1f4] sm:$0xf]
    %v185 = vld [vmem:[#allocation5 + $0x1f8] sm:$0xf]
    %v186 = vld [vmem:[#allocation5 + $0x1fc] sm:$0xf]
    %v191 = vunpack.c.l.b16 %v55
    %v192 = vunpack.c.h.b16 %v55
    %v193 = vunpack.c.l.b16 %v56
    %v194 = vunpack.c.h.b16 %v56
    %v195 = vunpack.c.l.b16 %v57
    %v196 = vunpack.c.h.b16 %v57
    %v197 = vunpack.c.l.b16 %v58
    %v198 = vunpack.c.h.b16 %v58
    %v199 = vpack.c.b16 %v191, %v191
    %v200 = vpack.c.b16 %v192, %v192
    %v201 = vpack.c.b16 %v193, %v193
    %v202 = vpack.c.b16 %v194, %v194
    %v203 = vpack.c.b16 %v195, %v195
    %v204 = vpack.c.b16 %v196, %v196
    %v205 = vpack.c.b16 %v197, %v197
    %v206 = vpack.c.b16 %v198, %v198
    %v343 = vunpack.c.l.b16 %v59
    %v344 = vunpack.c.l.b16 %v60
    %v345 = vunpack.c.l.b16 %v61
    %v346 = vunpack.c.l.b16 %v62
    %v347 = vunpack.c.l.b16 %v63
    %v348 = vunpack.c.l.b16 %v64
    %v349 = vunpack.c.l.b16 %v65
    %v350 = vunpack.c.l.b16 %v66
    %v351 = vunpack.c.l.b16 %v67
    %v352 = vunpack.c.l.b16 %v68
    %v353 = vunpack.c.l.b16 %v69
    %v354 = vunpack.c.l.b16 %v70
    %v355 = vunpack.c.l.b16 %v71
    %v356 = vunpack.c.l.b16 %v72
    %v357 = vunpack.c.l.b16 %v73
    %v358 = vunpack.c.l.b16 %v74
    %v359 = vunpack.c.l.b16 %v75
    %v360 = vunpack.c.l.b16 %v76
    %v361 = vunpack.c.l.b16 %v77
    %v362 = vunpack.c.l.b16 %v78
    %v363 = vunpack.c.l.b16 %v79
    %v364 = vunpack.c.l.b16 %v80
    %v365 = vunpack.c.l.b16 %v81
    %v366 = vunpack.c.l.b16 %v82
    %v367 = vunpack.c.l.b16 %v83
    %v368 = vunpack.c.l.b16 %v84
    %v369 = vunpack.c.l.b16 %v85
    %v370 = vunpack.c.l.b16 %v86
    %v371 = vunpack.c.l.b16 %v87
    %v372 = vunpack.c.l.b16 %v88
    %v373 = vunpack.c.l.b16 %v89
    %v374 = vunpack.c.l.b16 %v90
    %v375 = vunpack.c.l.b16 %v91
    %v376 = vunpack.c.l.b16 %v92
    %v377 = vunpack.c.l.b16 %v93
    %v378 = vunpack.c.l.b16 %v94
    %v379 = vunpack.c.l.b16 %v95
    %v380 = vunpack.c.l.b16 %v96
    %v381 = vunpack.c.l.b16 %v97
    %v382 = vunpack.c.l.b16 %v98
    %v383 = vunpack.c.l.b16 %v99
    %v384 = vunpack.c.l.b16 %v100
    %v385 = vunpack.c.l.b16 %v101
    %v386 = vunpack.c.l.b16 %v102
    %v387 = vunpack.c.l.b16 %v103
    %v388 = vunpack.c.l.b16 %v104
    %v389 = vunpack.c.l.b16 %v105
    %v390 = vunpack.c.l.b16 %v106
    %v391 = vunpack.c.l.b16 %v107
    %v392 = vunpack.c.l.b16 %v108
    %v393 = vunpack.c.l.b16 %v109
    %v394 = vunpack.c.l.b16 %v110
    %v395 = vunpack.c.l.b16 %v111
    %v396 = vunpack.c.l.b16 %v112
    %v397 = vunpack.c.l.b16 %v113
    %v398 = vunpack.c.l.b16 %v114
    %v399 = vunpack.c.l.b16 %v115
    %v400 = vunpack.c.l.b16 %v116
    %v401 = vunpack.c.l.b16 %v117
    %v402 = vunpack.c.l.b16 %v118
    %v403 = vunpack.c.l.b16 %v119
    %v404 = vunpack.c.l.b16 %v120
    %v405 = vunpack.c.l.b16 %v121
    %v406 = vunpack.c.l.b16 %v122
    %v407 = vunpack.c.l.b16 %v123
    %v408 = vunpack.c.l.b16 %v124
    %v409 = vunpack.c.l.b16 %v125
    %v410 = vunpack.c.l.b16 %v126
    %v411 = vunpack.c.l.b16 %v127
    %v412 = vunpack.c.l.b16 %v128
    %v413 = vunpack.c.l.b16 %v129
    %v414 = vunpack.c.l.b16 %v130
    %v415 = vunpack.c.l.b16 %v131
    %v416 = vunpack.c.l.b16 %v132
    %v417 = vunpack.c.l.b16 %v133
    %v418 = vunpack.c.l.b16 %v134
    %v419 = vunpack.c.l.b16 %v135
    %v420 = vunpack.c.l.b16 %v136
    %v421 = vunpack.c.l.b16 %v137
    %v422 = vunpack.c.l.b16 %v138
    %v423 = vunpack.c.l.b16 %v139
    %v424 = vunpack.c.l.b16 %v140
    %v425 = vunpack.c.l.b16 %v141
    %v426 = vunpack.c.l.b16 %v142
    %v427 = vunpack.c.l.b16 %v143
    %v428 = vunpack.c.l.b16 %v144
    %v429 = vunpack.c.l.b16 %v145
    %v430 = vunpack.c.l.b16 %v146
    %v431 = vunpack.c.l.b16 %v147
    %v432 = vunpack.c.l.b16 %v148
    %v433 = vunpack.c.l.b16 %v149
    %v434 = vunpack.c.l.b16 %v150
    %v435 = vunpack.c.l.b16 %v151
    %v436 = vunpack.c.l.b16 %v152
    %v437 = vunpack.c.l.b16 %v153
    %v438 = vunpack.c.l.b16 %v154
    %v439 = vunpack.c.l.b16 %v155
    %v440 = vunpack.c.l.b16 %v156
    %v441 = vunpack.c.l.b16 %v157
    %v442 = vunpack.c.l.b16 %v158
    %v443 = vunpack.c.l.b16 %v159
    %v444 = vunpack.c.l.b16 %v160
    %v445 = vunpack.c.l.b16 %v161
    %v446 = vunpack.c.l.b16 %v162
    %v447 = vunpack.c.l.b16 %v163
    %v448 = vunpack.c.l.b16 %v164
    %v449 = vunpack.c.l.b16 %v165
    %v450 = vunpack.c.l.b16 %v166
    %v451 = vunpack.c.l.b16 %v167
    %v452 = vunpack.c.l.b16 %v168
    %v453 = vunpack.c.l.b16 %v169
    %v454 = vunpack.c.l.b16 %v170
    %v455 = vunpack.c.l.b16 %v171
    %v456 = vunpack.c.l.b16 %v172
    %v457 = vunpack.c.l.b16 %v173
    %v458 = vunpack.c.l.b16 %v174
    %v459 = vunpack.c.l.b16 %v175
    %v460 = vunpack.c.l.b16 %v176
    %v461 = vunpack.c.l.b16 %v177
    %v462 = vunpack.c.l.b16 %v178
    %v463 = vunpack.c.l.b16 %v179
    %v464 = vunpack.c.l.b16 %v180
    %v465 = vunpack.c.l.b16 %v181
    %v466 = vunpack.c.l.b16 %v182
    %v467 = vunpack.c.l.b16 %v183
    %v468 = vunpack.c.l.b16 %v184
    %v469 = vunpack.c.l.b16 %v185
    %v470 = vunpack.c.l.b16 %v186
    %v471 = vpack.c.b16 %v344, %v343
    %v472 = vpack.c.b16 %v346, %v345
    %v473 = vpack.c.b16 %v348, %v347
    %v474 = vpack.c.b16 %v350, %v349
    %v475 = vpack.c.b16 %v352, %v351
    %v476 = vpack.c.b16 %v354, %v353
    %v477 = vpack.c.b16 %v356, %v355
    %v478 = vpack.c.b16 %v358, %v357
    %v479 = vpack.c.b16 %v360, %v359
    %v480 = vpack.c.b16 %v362, %v361
    %v481 = vpack.c.b16 %v364, %v363
    %v482 = vpack.c.b16 %v366, %v365
    %v483 = vpack.c.b16 %v368, %v367
    %v484 = vpack.c.b16 %v370, %v369
    %v485 = vpack.c.b16 %v372, %v371
    %v486 = vpack.c.b16 %v374, %v373
    %v487 = vpack.c.b16 %v376, %v375
    %v488 = vpack.c.b16 %v378, %v377
    %v489 = vpack.c.b16 %v380, %v379
    %v490 = vpack.c.b16 %v382, %v381
    %v491 = vpack.c.b16 %v384, %v383
    %v492 = vpack.c.b16 %v386, %v385
    %v493 = vpack.c.b16 %v388, %v387
    %v494 = vpack.c.b16 %v390, %v389
    %v495 = vpack.c.b16 %v392, %v391
    %v496 = vpack.c.b16 %v394, %v393
    %v497 = vpack.c.b16 %v396, %v395
    %v498 = vpack.c.b16 %v398, %v397
    %v499 = vpack.c.b16 %v400, %v399
    %v500 = vpack.c.b16 %v402, %v401
    %v501 = vpack.c.b16 %v404, %v403
    %v502 = vpack.c.b16 %v406, %v405
    %v503 = vpack.c.b16 %v408, %v407
    %v504 = vpack.c.b16 %v410, %v409
    %v505 = vpack.c.b16 %v412, %v411
    %v506 = vpack.c.b16 %v414, %v413
    %v507 = vpack.c.b16 %v416, %v415
    %v508 = vpack.c.b16 %v418, %v417
    %v509 = vpack.c.b16 %v420, %v419
    %v510 = vpack.c.b16 %v422, %v421
    %v511 = vpack.c.b16 %v424, %v423
    %v512 = vpack.c.b16 %v426, %v425
    %v513 = vpack.c.b16 %v428, %v427
    %v514 = vpack.c.b16 %v430, %v429
    %v515 = vpack.c.b16 %v432, %v431
    %v516 = vpack.c.b16 %v434, %v433
    %v517 = vpack.c.b16 %v436, %v435
    %v518 = vpack.c.b16 %v438, %v437
    %v519 = vpack.c.b16 %v440, %v439
    %v520 = vpack.c.b16 %v442, %v441
    %v521 = vpack.c.b16 %v444, %v443
    %v522 = vpack.c.b16 %v446, %v445
    %v523 = vpack.c.b16 %v448, %v447
    %v524 = vpack.c.b16 %v450, %v449
    %v525 = vpack.c.b16 %v452, %v451
    %v526 = vpack.c.b16 %v454, %v453
    %v527 = vpack.c.b16 %v456, %v455
    %v528 = vpack.c.b16 %v458, %v457
    %v529 = vpack.c.b16 %v460, %v459
    %v530 = vpack.c.b16 %v462, %v461
    %v531 = vpack.c.b16 %v464, %v463
    %v532 = vpack.c.b16 %v466, %v465
    %v533 = vpack.c.b16 %v468, %v467
    %v534 = vpack.c.b16 %v470, %v469
    %599 = vmatprep.subr.bf16.mxu0 0
    %600 = vmatpush1.bf16.msra.mxu0 %v471
    %601 = vmatprep.subr.bf16.mxu0 0
    %602 = vmatpush1.bf16.msra.mxu0 %v472
    %603 = vmatprep.subr.bf16.mxu0 0
    %604 = vmatpush1.bf16.msra.mxu0 %v473
    %605 = vmatprep.subr.bf16.mxu0 0
    %606 = vmatpush1.bf16.msra.mxu0 %v474
    %607 = vmatprep.subr.bf16.mxu0 0
    %608 = vmatpush1.bf16.msra.mxu0 %v475
    %609 = vmatprep.subr.bf16.mxu0 0
    %610 = vmatpush1.bf16.msra.mxu0 %v476
    %611 = vmatprep.subr.bf16.mxu0 0
    %612 = vmatpush1.bf16.msra.mxu0 %v477
    %613 = vmatprep.subr.bf16.mxu0 0
    %614 = vmatpush1.bf16.msra.mxu0 %v478
    %615 = vmatprep.subr.bf16.mxu0 0
    %616 = vmatpush1.bf16.msra.mxu0 %v479
    %617 = vmatprep.subr.bf16.mxu0 0
    %618 = vmatpush1.bf16.msra.mxu0 %v480
    %619 = vmatprep.subr.bf16.mxu0 0
    %620 = vmatpush1.bf16.msra.mxu0 %v481
    %621 = vmatprep.subr.bf16.mxu0 0
    %622 = vmatpush1.bf16.msra.mxu0 %v482
    %623 = vmatprep.subr.bf16.mxu0 0
    %624 = vmatpush1.bf16.msra.mxu0 %v483
    %625 = vmatprep.subr.bf16.mxu0 0
    %626 = vmatpush1.bf16.msra.mxu0 %v484
    %627 = vmatprep.subr.bf16.mxu0 0
    %628 = vmatpush1.bf16.msra.mxu0 %v485
    %629 = vmatprep.subr.bf16.mxu0 0
    %630 = vmatpush1.bf16.msra.mxu0 %v486
    %631 = vmatprep.mubr.bf16.mxu0 %v200
    %632 = vmatmul.mubr.bf16.gmra.mrb[0].mxu0 %v199
    %v633 = vpop.f32.mrb[0].mxu0
    %v634 = vadd.f32 0.0, %v633
    %v635 = vpop.f32.mrb[0].mxu0
    %v636 = vpop.f32.mrb[0].mxu0
    %v637 = vpop.f32.mrb[0].mxu0
    %638 = vdwg.mxu0
    %639 = vmatprep.subr.bf16.mxu0 0
    %640 = vmatpush1.bf16.msra.mxu0 %v487
    %641 = vmatprep.subr.bf16.mxu0 0
    %642 = vmatpush1.bf16.msra.mxu0 %v488
    %643 = vmatprep.subr.bf16.mxu0 0
    %644 = vmatpush1.bf16.msra.mxu0 %v489
    %645 = vmatprep.subr.bf16.mxu0 0
    %646 = vmatpush1.bf16.msra.mxu0 %v490
    %647 = vmatprep.subr.bf16.mxu0 0
    %648 = vmatpush1.bf16.msra.mxu0 %v491
    %649 = vmatprep.subr.bf16.mxu0 0
    %650 = vmatpush1.bf16.msra.mxu0 %v492
    %651 = vmatprep.subr.bf16.mxu0 0
    %652 = vmatpush1.bf16.msra.mxu0 %v493
    %653 = vmatprep.subr.bf16.mxu0 0
    %654 = vmatpush1.bf16.msra.mxu0 %v494
    %655 = vmatprep.subr.bf16.mxu0 0
    %656 = vmatpush1.bf16.msra.mxu0 %v495
    %657 = vmatprep.subr.bf16.mxu0 0
    %658 = vmatpush1.bf16.msra.mxu0 %v496
    %659 = vmatprep.subr.bf16.mxu0 0
    %660 = vmatpush1.bf16.msra.mxu0 %v497
    %661 = vmatprep.subr.bf16.mxu0 0
    %662 = vmatpush1.bf16.msra.mxu0 %v498
    %663 = vmatprep.subr.bf16.mxu0 0
    %664 = vmatpush1.bf16.msra.mxu0 %v499
    %665 = vmatprep.subr.bf16.mxu0 0
    %666 = vmatpush1.bf16.msra.mxu0 %v500
    %667 = vmatprep.subr.bf16.mxu0 0
    %668 = vmatpush1.bf16.msra.mxu0 %v501
    %669 = vmatprep.subr.bf16.mxu0 0
    %670 = vmatpush1.bf16.msra.mxu0 %v502
    %671 = vmatprep.mubr.bf16.mxu0 %v202
    %672 = vmatmul.mubr.bf16.gmra.mrb[0].mxu0 %v201
    %v673 = vpop.f32.mrb[0].mxu0
    %v674 = vadd.f32 %v634, %v673
    %v675 = vpop.f32.mrb[0].mxu0
    %v676 = vpop.f32.mrb[0].mxu0
    %v677 = vpop.f32.mrb[0].mxu0
    %678 = vdwg.mxu0
    %679 = vmatprep.subr.bf16.mxu0 0
    %680 = vmatpush1.bf16.msra.mxu0 %v503
    %681 = vmatprep.subr.bf16.mxu0 0
    %682 = vmatpush1.bf16.msra.mxu0 %v504
    %683 = vmatprep.subr.bf16.mxu0 0
    %684 = vmatpush1.bf16.msra.mxu0 %v505
    %685 = vmatprep.subr.bf16.mxu0 0
    %686 = vmatpush1.bf16.msra.mxu0 %v506
    %687 = vmatprep.subr.bf16.mxu0 0
    %688 = vmatpush1.bf16.msra.mxu0 %v507
    %689 = vmatprep.subr.bf16.mxu0 0
    %690 = vmatpush1.bf16.msra.mxu0 %v508
    %691 = vmatprep.subr.bf16.mxu0 0
    %692 = vmatpush1.bf16.msra.mxu0 %v509
    %693 = vmatprep.subr.bf16.mxu0 0
    %694 = vmatpush1.bf16.msra.mxu0 %v510
    %695 = vmatprep.subr.bf16.mxu0 0
    %696 = vmatpush1.bf16.msra.mxu0 %v511
    %697 = vmatprep.subr.bf16.mxu0 0
    %698 = vmatpush1.bf16.msra.mxu0 %v512
    %699 = vmatprep.subr.bf16.mxu0 0
    %700 = vmatpush1.bf16.msra.mxu0 %v513
    %701 = vmatprep.subr.bf16.mxu0 0
    %702 = vmatpush1.bf16.msra.mxu0 %v514
    %703 = vmatprep.subr.bf16.mxu0 0
    %704 = vmatpush1.bf16.msra.mxu0 %v515
    %705 = vmatprep.subr.bf16.mxu0 0
    %706 = vmatpush1.bf16.msra.mxu0 %v516
    %707 = vmatprep.subr.bf16.mxu0 0
    %708 = vmatpush1.bf16.msra.mxu0 %v517
    %709 = vmatprep.subr.bf16.mxu0 0
    %710 = vmatpush1.bf16.msra.mxu0 %v518
    %711 = vmatprep.mubr.bf16.mxu0 %v204
    %712 = vmatmul.mubr.bf16.gmra.mrb[0].mxu0 %v203
    %v713 = vpop.f32.mrb[0].mxu0
    %v714 = vadd.f32 %v674, %v713
    %v715 = vpop.f32.mrb[0].mxu0
    %v716 = vpop.f32.mrb[0].mxu0
    %v717 = vpop.f32.mrb[0].mxu0
    %718 = vdwg.mxu0
    %719 = vmatprep.subr.bf16.mxu0 0
    %720 = vmatpush1.bf16.msra.mxu0 %v519
    %721 = vmatprep.subr.bf16.mxu0 0
    %722 = vmatpush1.bf16.msra.mxu0 %v520
    %723 = vmatprep.subr.bf16.mxu0 0
    %724 = vmatpush1.bf16.msra.mxu0 %v521
    %725 = vmatprep.subr.bf16.mxu0 0
    %726 = vmatpush1.bf16.msra.mxu0 %v522
    %727 = vmatprep.subr.bf16.mxu0 0
    %728 = vmatpush1.bf16.msra.mxu0 %v523
    %729 = vmatprep.subr.bf16.mxu0 0
    %730 = vmatpush1.bf16.msra.mxu0 %v524
    %731 = vmatprep.subr.bf16.mxu0 0
    %732 = vmatpush1.bf16.msra.mxu0 %v525
    %733 = vmatprep.subr.bf16.mxu0 0
    %734 = vmatpush1.bf16.msra.mxu0 %v526
    %735 = vmatprep.subr.bf16.mxu0 0
    %736 = vmatpush1.bf16.msra.mxu0 %v527
    %737 = vmatprep.subr.bf16.mxu0 0
    %738 = vmatpush1.bf16.msra.mxu0 %v528
    %739 = vmatprep.subr.bf16.mxu0 0
    %740 = vmatpush1.bf16.msra.mxu0 %v529
    %741 = vmatprep.subr.bf16.mxu0 0
    %742 = vmatpush1.bf16.msra.mxu0 %v530
    %743 = vmatprep.subr.bf16.mxu0 0
    %744 = vmatpush1.bf16.msra.mxu0 %v531
    %745 = vmatprep.subr.bf16.mxu0 0
    %746 = vmatpush1.bf16.msra.mxu0 %v532
    %747 = vmatprep.subr.bf16.mxu0 0
    %748 = vmatpush1.bf16.msra.mxu0 %v533
    %749 = vmatprep.subr.bf16.mxu0 0
    %750 = vmatpush1.bf16.msra.mxu0 %v534
    %751 = vmatprep.mubr.bf16.mxu0 %v206
    %752 = vmatmul.mubr.bf16.gmra.mrb[0].mxu0 %v205
    %v753 = vpop.f32.mrb[0].mxu0
    %v754 = vadd.f32 %v714, %v753
    %v755 = vpop.f32.mrb[0].mxu0
    %v756 = vpop.f32.mrb[0].mxu0
    %v757 = vpop.f32.mrb[0].mxu0
    %758 = vdwg.mxu0
    %v759 = vmax.f32 %v754, 0.0
    %v760 = vpack.c.bf16 %v759, %v759
    %v761 = vld [vmem:[#allocation7] sm:$0xf]
    %v762 = vld [vmem:[#allocation7 + $0x4] sm:$0xf]
    %v763 = vld [vmem:[#allocation7 + $0x8] sm:$0xf]
    %v764 = vld [vmem:[#allocation7 + $0xc] sm:$0xf]
    %v765 = vld [vmem:[#allocation7 + $0x10] sm:$0xf]
    %v766 = vld [vmem:[#allocation7 + $0x14] sm:$0xf]
    %v767 = vld [vmem:[#allocation7 + $0x18] sm:$0xf]
    %v768 = vld [vmem:[#allocation7 + $0x1c] sm:$0xf]
    %v769 = vld [vmem:[#allocation7 + $0x20] sm:$0xf]
    %v770 = vld [vmem:[#allocation7 + $0x24] sm:$0xf]
    %v771 = vld [vmem:[#allocation7 + $0x28] sm:$0xf]
    %v772 = vld [vmem:[#allocation7 + $0x2c] sm:$0xf]
    %v773 = vld [vmem:[#allocation7 + $0x30] sm:$0xf]
    %v774 = vld [vmem:[#allocation7 + $0x34] sm:$0xf]
    %v775 = vld [vmem:[#allocation7 + $0x38] sm:$0xf]
    %v776 = vld [vmem:[#allocation7 + $0x3c] sm:$0xf]
    %v793 = vunpack.c.l.b16 %v761
    %v794 = vunpack.c.l.b16 %v762
    %v795 = vunpack.c.l.b16 %v763
    %v796 = vunpack.c.l.b16 %v764
    %v797 = vunpack.c.l.b16 %v765
    %v798 = vunpack.c.l.b16 %v766
    %v799 = vunpack.c.l.b16 %v767
    %v800 = vunpack.c.l.b16 %v768
    %v801 = vunpack.c.l.b16 %v769
    %v802 = vunpack.c.l.b16 %v770
    %v803 = vunpack.c.l.b16 %v771
    %v804 = vunpack.c.l.b16 %v772
    %v805 = vunpack.c.l.b16 %v773
    %v806 = vunpack.c.l.b16 %v774
    %v807 = vunpack.c.l.b16 %v775
    %v808 = vunpack.c.l.b16 %v776
    %v809 = vpack.c.b16 %v794, %v793
    %v810 = vpack.c.b16 %v796, %v795
    %v811 = vpack.c.b16 %v798, %v797
    %v812 = vpack.c.b16 %v800, %v799
    %v813 = vpack.c.b16 %v802, %v801
    %v814 = vpack.c.b16 %v804, %v803
    %v815 = vpack.c.b16 %v806, %v805
    %v816 = vpack.c.b16 %v808, %v807
    %825 = vmatprep.subr.bf16.mxu0 0
    %826 = vmatpush1.bf16.msra.mxu0 %v809
    %827 = vmatprep.subr.bf16.mxu0 0
    %828 = vmatpush1.bf16.msra.mxu0 %v810
    %829 = vmatprep.subr.bf16.mxu0 0
    %830 = vmatpush1.bf16.msra.mxu0 %v811
    %831 = vmatprep.subr.bf16.mxu0 0
    %832 = vmatpush1.bf16.msra.mxu0 %v812
    %833 = vmatprep.subr.bf16.mxu0 0
    %834 = vmatpush1.bf16.msra.mxu0 %v813
    %835 = vmatprep.subr.bf16.mxu0 0
    %836 = vmatpush1.bf16.msra.mxu0 %v814
    %837 = vmatprep.subr.bf16.mxu0 0
    %838 = vmatpush1.bf16.msra.mxu0 %v815
    %839 = vmatprep.subr.bf16.mxu0 0
    %840 = vmatpush1.bf16.msra.mxu0 %v816
    %841 = vmatprep.subr.bf16.mxu0 0
    %842 = vmatpush1.bf16.msra.mxu0 0
    %843 = vmatprep.subr.bf16.mxu0 0
    %844 = vmatpush1.bf16.msra.mxu0 0
    %845 = vmatprep.subr.bf16.mxu0 0
    %846 = vmatpush1.bf16.msra.mxu0 0
    %847 = vmatprep.subr.bf16.mxu0 0
    %848 = vmatpush1.bf16.msra.mxu0 0
    %849 = vmatprep.subr.bf16.mxu0 0
    %850 = vmatpush1.bf16.msra.mxu0 0
    %851 = vmatprep.subr.bf16.mxu0 0
    %852 = vmatpush1.bf16.msra.mxu0 0
    %853 = vmatprep.subr.bf16.mxu0 0
    %854 = vmatpush1.bf16.msra.mxu0 0
    %855 = vmatprep.subr.bf16.mxu0 0
    %856 = vmatpush1.bf16.msra.mxu0 0
    %857 = vmatprep.mubr.bf16.mxu0 0
    %858 = vmatmul.mubr.bf16.gmra.mrb[0].mxu0 %v760
    %v859 = vpop.f32.mrb[0].mxu0
    %v860 = vadd.f32 0.0, %v859
    %v861 = vpop.f32.mrb[0].mxu0
    %v862 = vpop.f32.mrb[0].mxu0
    %v863 = vpop.f32.mrb[0].mxu0
    %864 = vdwg.mxu0
    %v865 = vlaneseq
    %v866 = vand.u32 %v865, 127
    %vm867 = vcmp.lt.s32.totalorder %v866, 10
    %v868 = vsel %vm867, %v860, -inf
    %869 = vmax.xlane.f32.xlu0 %v868
    %v870 = vpop.xlane.xlu0 %869
    %v871 = vsub.f32 %v868, %v870
    %v872 = vmul.f32 %v871, 1.442695
    %v873 = vpow.pop %v872
    %874 = vadd.xlane.f32.xlu0 %v873
    %v875 = vpop.xlane.xlu0 %874
    %v876 = vlog2.pop %v875
    %v877 = vmul.f32 %v876, 0.6931472
    %v878 = vsub.f32 %v871, %v877
    %879 = vst [vmem:[#allocation8] sm:$0xff] %v878
    // Predicated region
    $region26: #{tpu_custom_call.1} parent=1 // pred_check
      _
    $region27: #{tpu_custom_call.1} parent=1 // pred_check_branch
      %881 = sbr.rel (0) target = $region29
    $region28: #{tpu_custom_call.1} parent=1 // pred_region
      %s883 = ssub.s32 128, 128
      %884 = vsyncadd [#allocation4], %s883
      %s886 = sshll.u32 [#allocation8], 4
      %s887 = int_to_ptr.vmem [resolvable:$true] %s886
      %889 = dma.vmem_to_hbm [thread:$0]  %s887, 128, %s3, [#allocation4]
    $region29: #{tpu_custom_call.1} parent=1 // pred_fallthru
      _
    // Predicated region
    $region30: #{tpu_custom_call.1} parent=1 // pred_check
      _
    $region31: #{tpu_custom_call.1} parent=1 // pred_check_branch
      %891 = sbr.rel (0) target = $region33
    $region32: #{tpu_custom_call.1} parent=1 // pred_region
      %892 = dma.done [#allocation4], 128
    $region33: #{tpu_custom_call.1} parent=1 // pred_fallthru
      _
    %893 = vsyncpa [#allocation3], 1
    %894 = vsyncpa [#allocation6], 1
    %895 = vsyncpa [#allocation4], 1

</llo_original>
